<compile_context>
chip_gen: v6e
topology: v6e:2x2x1
jax: 0.10.0
libtpu: 0.0.40
codegen_flags: <defaults>
</compile_context>

<pallas_src>
import jax
import jax.numpy as jnp
from jax.experimental import pallas as pl
from jax.experimental.pallas import tpu as pltpu


def _conv3x3_relu_kernel(x_ref, w_ref, b_ref, o_ref):
    """One batch-block of im2row rows per grid step.

    x_ref: (bN*H, 3*W*Cin)   im2row LHS rows (vertical halo already applied)
    w_ref: (3*W*Cin, W*Cout) collapsed banded weight (dx taps + W-padding folded in)
    b_ref: (1, W*Cout)       bias tiled along the lane axis
    o_ref: (bN*H, W*Cout)    lane-dense output rows
    """
    acc = jnp.dot(x_ref[...], w_ref[...], preferred_element_type=jnp.float32)
    acc = acc + b_ref[...].astype(jnp.float32)
    # Lane-dense store: unmasked vst when W*Cout is a multiple of 128.
    o_ref[...] = jnp.maximum(acc, 0.0).astype(o_ref.dtype)


def _band_weights(weight, W):
    """weight: (Cout, Cin, 3, 3) OIHW -> (3*W*Cin, W*Cout) collapsed banded weight.

    WB[dy, wi*Cin + ci, wo*Cout + co] = weight[co, ci, dy, wi - wo + 1]
    and 0 when wi - wo + 1 is outside [0, 2] (this also implements padding=1
    along the width axis for free).  The dy axis is then folded into K to match
    the im2row LHS layout [dy=0 cols | dy=1 cols | dy=2 cols].
    """
    Cout, Cin, KH, KW = weight.shape
    wt = jnp.transpose(weight, (2, 3, 1, 0))            # (dy, dx, ci, co)
    wi = jnp.arange(W)[:, None]                         # input column
    wo = jnp.arange(W)[None, :]                         # output column
    dx = wi - wo + 1                                    # (W, W)
    valid = (dx >= 0) & (dx <= KW - 1)
    dxc = jnp.clip(dx, 0, KW - 1)
    band = wt[:, dxc]                                    # (3, W, W, Cin, Cout)
    band = jnp.where(valid[None, :, :, None, None], band, 0.0)
    band = jnp.transpose(band, (0, 1, 3, 2, 4))          # (3, W, Cin, W, Cout)
    return band.reshape(KH * W * Cin, W * Cout)


def _pick_batch_block(N, H, target_rows=256):
    """Largest divisor bN of N with bN*H <= target_rows, keeping >= 2 grid
    steps when N >= 2 so both v7x TensorCores get work."""
    best = 1
    for bn in range(1, N + 1):
        if N % bn:
            continue
        if bn * H > target_rows:
            continue
        if N >= 2 and (N // bn) < 2:
            continue
        best = bn
    return best


def convolution_layer_forward(x_nchw, weight, bias):
    """x_nchw: (N, Cin, H, W); weight: (Cout, Cin, 3, 3); bias: (Cout,).

    Returns (N, Cout, H, W) = ReLU(Conv2d(k=3, padding=1)(x)), matching PyTorch.
    """
    N, Cin, H, W = x_nchw.shape
    Cout = weight.shape[0]
    WC, WCo = W * Cin, W * Cout
    K = 3 * WC

    # ---- Wrapper-side layout prep (fuses into one XLA copy per tensor) ------
    # NCHW -> channels-last row slabs (N, H, W*Cin).
    x_rows = jnp.transpose(x_nchw, (0, 2, 3, 1)).reshape(N, H, WC)
    # Vertical zero halo (padding=1 along H), then im2row along H:
    # LHS row h = [rows h, h+1, h+2 of the padded image] concatenated on lanes.
    x_pad = jnp.pad(x_rows, ((0, 0), (1, 1), (0, 0)))           # (N, H+2, WC)
    lhs = jnp.concatenate(
        [x_pad[:, 0:H, :], x_pad[:, 1:H + 1, :], x_pad[:, 2:H + 2, :]],
        axis=-1).reshape(N * H, K)                              # (N*H, 3*W*Cin)

    wb = _band_weights(weight, W)                               # (3*W*Cin, W*Cout)
    b_rows = jnp.tile(bias, W).reshape(1, WCo)                  # bias[co] at wo*Cout+co

    bN = _pick_batch_block(N, H)
    rows_per_step = bN * H
    grid = (N // bN,)

    out_rows = pl.pallas_call(
        _conv3x3_relu_kernel,
        out_shape=jax.ShapeDtypeStruct((N * H, WCo), x_nchw.dtype),
        grid_spec=pltpu.PrefetchScalarGridSpec(
            num_scalar_prefetch=0,
            grid=grid,
            in_specs=[
                # bN images' worth of im2row rows per grid step
                pl.BlockSpec((rows_per_step, K), lambda n: (n, 0)),
                # banded weight + bias: constant index map -> resident
                pl.BlockSpec((K, WCo), lambda n: (0, 0)),
                pl.BlockSpec((1, WCo), lambda n: (0, 0)),
            ],
            out_specs=pl.BlockSpec((rows_per_step, WCo), lambda n: (n, 0)),
        ),
        compiler_params=pltpu.CompilerParams(
            dimension_semantics=("parallel",),
        ),
    )(lhs, wb, b_rows)

    out_nhwc = out_rows.reshape(N, H, W, Cout)                  # contiguous reshape
    return jnp.transpose(out_nhwc, (0, 3, 1, 2))                # (N, Cout, H, W)


def init_params(key, in_channels, out_channels, k=3):
    """Deterministic init mimicking PyTorch Conv2d default (kaiming-uniform-ish)."""
    kw, kb = jax.random.split(key)
    fan_in = in_channels * k * k
    bound = 1.0 / jnp.sqrt(fan_in)
    weight = jax.random.uniform(
        kw, (out_channels, in_channels, k, k), jnp.float32, -bound, bound)
    bias = jax.random.uniform(kb, (out_channels,), jnp.float32, -bound, bound)
    return weight, bias


if __name__ == "__main__":
    key = jax.random.PRNGKey(0)
    kx, kp = jax.random.split(key)

    N, Cin, H, W = 2, 4, 16, 16
    Cout = 8

    x = jax.random.normal(kx, (N, Cin, H, W), dtype=jnp.float32)
    weight, bias = init_params(kp, Cin, Cout)

    out = convolution_layer_forward(x, weight, bias)
    out = jax.block_until_ready(out)

    # Pure-JAX reference (same semantics as torch.nn.Conv2d(k=3, pad=1) + ReLU).
    ref = jax.lax.conv_general_dilated(
        x, weight, window_strides=(1, 1), padding=((1, 1), (1, 1)),
        dimension_numbers=("NCHW", "OIHW", "NCHW"))
    ref = jnp.maximum(ref + bias.reshape(1, Cout, 1, 1), 0.0)

    assert out.shape == (N, Cout, H, W)
    assert jnp.allclose(out, ref, rtol=1e-4, atol=1e-4)

    print("KERNEL_OK")
</pallas_src>

<mosaic_0001>
module attributes {stable_mosaic.version = 11 : i64} {
  func.func @_conv3x3_relu_kernel(%arg0: i32, %arg1: memref<16x192xf32, #tpu.memory_space<vmem>>, %arg2: memref<192x128xf32, #tpu.memory_space<vmem>>, %arg3: memref<1x128xf32, #tpu.memory_space<vmem>>, %arg4: memref<16x128xf32, #tpu.memory_space<vmem>>) attributes {dimension_semantics = [#tpu.dimension_semantics<parallel>], iteration_bounds = array<i64: 2>, scalar_prefetch = 0 : i64, scratch_operands = 0 : i64, tpu.core_type = #tpu.core_type<tc>, window_params = [{transform_indices = @transform_0, window_bounds = array<i64: 16, 192>}, {pipeline_mode = #tpu.pipeline_mode<synchronous>, transform_indices = @transform_1, window_bounds = array<i64: 192, 128>}, {pipeline_mode = #tpu.pipeline_mode<synchronous>, transform_indices = @transform_2, window_bounds = array<i64: 1, 128>}, {transform_indices = @transform_3, window_bounds = array<i64: 16, 128>}]} {
    %c0 = arith.constant 0 : index
    %c0_0 = arith.constant 0 : index
    %0 = vector.load %arg1[%c0, %c0_0] : memref<16x192xf32, #tpu.memory_space<vmem>>, vector<16x192xf32>
    %c0_1 = arith.constant 0 : index
    %c0_2 = arith.constant 0 : index
    %1 = vector.load %arg2[%c0_1, %c0_2] : memref<192x128xf32, #tpu.memory_space<vmem>>, vector<192x128xf32>
    %cst = arith.constant dense<0.000000e+00> : vector<16x128xf32>
    %2 = tpu.matmul %0, %1, %cst {dimension_numbers = #tpu.dot_dimension_numbers<[1], [0], [0], [1], [0, 0, 1, 1], [], []>} : vector<16x192xf32>, vector<192x128xf32>, vector<16x128xf32> -> vector<16x128xf32>
    %c0_3 = arith.constant 0 : index
    %c0_4 = arith.constant 0 : index
    %3 = vector.load %arg3[%c0_3, %c0_4] : memref<1x128xf32, #tpu.memory_space<vmem>>, vector<1x128xf32>
    %4 = vector.broadcast %3 : vector<1x128xf32> to vector<16x128xf32>
    %5 = arith.addf %2, %4 : vector<16x128xf32>
    %cst_5 = arith.constant 0.000000e+00 : f32
    %6 = vector.broadcast %cst_5 : f32 to vector<16x128xf32>
    %7 = arith.maximumf %5, %6 : vector<16x128xf32>
    %c0_6 = arith.constant 0 : index
    %c0_7 = arith.constant 0 : index
    %8 = vector.load %arg4[%c0_6, %c0_7] : memref<16x128xf32, #tpu.memory_space<vmem>>, vector<16x128xf32>
    tpu.vector_store %arg4[%c0_6, %c0_7], %7 {strides = array<i32>} : memref<16x128xf32, #tpu.memory_space<vmem>>, vector<16x128xf32>,
    return
  }
  func.func @transform_0(%arg0: i32) -> (i32, i32) {
    %c0_i32 = arith.constant 0 : i32
    %c0_i32_0 = arith.constant 0 : i32
    return %arg0, %c0_i32 : i32, i32
  }
  func.func @transform_1(%arg0: i32) -> (i32, i32) {
    %c0_i32 = arith.constant 0 : i32
    %c0_i32_0 = arith.constant 0 : i32
    %c0_i32_1 = arith.constant 0 : i32
    return %c0_i32, %c0_i32_0 : i32, i32
  }
  func.func @transform_2(%arg0: i32) -> (i32, i32) {
    %c0_i32 = arith.constant 0 : i32
    %c0_i32_0 = arith.constant 0 : i32
    %c0_i32_1 = arith.constant 0 : i32
    return %c0_i32, %c0_i32_0 : i32, i32
  }
  func.func @transform_3(%arg0: i32) -> (i32, i32) {
    %c0_i32 = arith.constant 0 : i32
    %c0_i32_0 = arith.constant 0 : i32
    return %arg0, %c0_i32 : i32, i32
  }
}

</mosaic_0001>

<llo_original>
// kernel: tpu_custom_call.1
$region0: #{tpu_custom_call.1}
  #allocation0 [shape = 'u32[]', space=smem, size = 0x4, offset = 0x4, fixed_abs, tag = 'smem constant byte address 0x4 - core index']
  #allocation1 [shape = 'u32[144,128]{1,0:T(1,128)}', space=vmem, size = 0x12000, scoped, tag = 'internal scratch']
  %s0 = inlined_call_operand.hbm [shape: f32[32,192], index: 0, kind: input, shape index: {}]
  %s1 = inlined_call_operand.hbm [shape: f32[192,128], index: 1, kind: input, shape index: {}]
  %s2 = inlined_call_operand.vmem [shape: f32[1,128], index: 2, kind: input, shape index: {}]
  %s3 = inlined_call_operand.hbm [shape: f32[32,128], index: 3, kind: output, shape index: {}]
  %s4 = sld [smem:[#allocation0]]
  $region53: #{tpu_custom_call.1} parent=0
    _
  %s6 = ssub.s32 1, %s4
  %s7 = scalar_select 0, %s6, %s4
  $region1: #{tpu_custom_call.1} parent=0
    #allocation2 [shape = 'u8[32768]{0}', space=vmem, size = 0x8000, scoped, tag = 'input window, operand 0']
    #allocation3 [shape = 's32[2]{0}', space=sflag, size = 0x8, scoped, tag = 'scoped memory for tpu_custom_call.1']
    #allocation4 [shape = 's32[2]{0}', space=sflag, size = 0x8, scoped, tag = 'scoped memory for tpu_custom_call.1']
    #allocation5 [shape = 'u8[98304]{0}', space=vmem, size = 0x18000, scoped, tag = 'input window, operand 1, single buffered']
    #allocation6 [shape = 's32[1]{0}', space=sflag, size = 0x4, scoped, tag = 'scoped memory for tpu_custom_call.1']
    #allocation7 [shape = 'u8[16384]{0}', space=vmem, size = 0x4000, scoped, tag = 'output window, operand 0']
    %8 = vsyncpa [#allocation3], 0
    %s9 = scalar_lea.sflag [#allocation3], 1
    %10 = vsyncpa %s9, 0
    %11 = vsyncpa [#allocation6], 0
    %12 = vsyncpa [#allocation4], 0
    %s13 = scalar_lea.sflag [#allocation4], 1
    %14 = vsyncpa %s13, 0
    loop: start=0, step=1, limit=4
    $region2: #{tpu_custom_call.1} parent=1 // loop_pre_header
      _
    $region3: #{tpu_custom_call.1} parent=1 // loop_header
      %s16 = sphi 0, %s20
      %p17 = scmp.ge.s32.totalorder %s16, 4
      %s26 = sphi 0, %s28
      %s29 = sphi 0, %s26
      %s30 = sphi 0, %s29
      %s46 = sphi 0, %s30
      %s50 = sphi 0, %s50
      %s52 = sphi 0, %s50
      %s53 = sphi 0, %s52
      %s67 = sphi 0, %s53
      %s71 = sphi 0, %s71
      %s73 = sphi 0, %s71
      %s74 = sphi 0, %s73
      %s88 = sphi 0, %s74
      %s94 = sphi 0, %s96
      %s97 = sphi 0, %s94
      %s98 = sphi 0, %s97
      %s114 = sphi 0, %s98
    $region4: #{tpu_custom_call.1} parent=1 // loop_header_branch
      %19 = sbr.rel (%p17) target = $region8
    $region5: #{tpu_custom_call.1} parent=1 // loop_body
      %s21 = ssub.s32 %s16, 1
      %s22 = ssub.s32 %s16, 2
      %s23 = sadd.s32 %s16, 1
      %s24 = ssub.s32 %s16, %s23
      %p25 = scmp.eq.s32.totalorder %s24, 0
      %s27 = sadd.s32 %s26, 1
      %s28 = scalar_select %p25, %s26, %s27
      %p31 = pneg %p25
      %p32 = scmp.eq.s32.totalorder %s16, 1
      %p33 = por %p31, %p32
      %p34 = scmp.ne.s32.totalorder %s26, %s29
      %p35 = scmp.eq.s32.totalorder %s16, 0
      %p36 = por %p34, %p35
      %p37 = scmp.ne.s32.totalorder %s26, %s29
      %p38 = scmp.eq.s32.totalorder %s21, 1
      %p39 = por %p37, %p38
      %p40 = scmp.ne.s32.totalorder %s29, %s30
      %p41 = scmp.eq.s32.totalorder %s21, 0
      %p42 = por %p40, %p41
      %p43 = scmp.ne.s32.totalorder %s29, %s30
      %p44 = scmp.eq.s32.totalorder %s22, 1
      %p45 = por %p43, %p44
      %p47 = scmp.ne.s32.totalorder %s30, %s46
      %p48 = scmp.eq.s32.totalorder %s22, 0
      %p49 = por %p47, %p48
      %s51 = sadd.s32 %s50, 1
      %p54 = scmp.eq.s32.totalorder %s16, 1
      %p55 = scmp.ne.s32.totalorder %s50, %s52
      %p56 = scmp.eq.s32.totalorder %s16, 0
      %p57 = por %p55, %p56
      %p58 = scmp.ne.s32.totalorder %s50, %s52
      %p59 = scmp.eq.s32.totalorder %s21, 1
      %p60 = por %p58, %p59
      %p61 = scmp.ne.s32.totalorder %s52, %s53
      %p62 = scmp.eq.s32.totalorder %s21, 0
      %p63 = por %p61, %p62
      %p64 = scmp.ne.s32.totalorder %s52, %s53
      %p65 = scmp.eq.s32.totalorder %s22, 1
      %p66 = por %p64, %p65
      %p68 = scmp.ne.s32.totalorder %s53, %s67
      %p69 = scmp.eq.s32.totalorder %s22, 0
      %p70 = por %p68, %p69
      %s72 = sadd.s32 %s71, 1
      %p75 = scmp.eq.s32.totalorder %s16, 1
      %p76 = scmp.ne.s32.totalorder %s71, %s73
      %p77 = scmp.eq.s32.totalorder %s16, 0
      %p78 = por %p76, %p77
      %p79 = scmp.ne.s32.totalorder %s71, %s73
      %p80 = scmp.eq.s32.totalorder %s21, 1
      %p81 = por %p79, %p80
      %p82 = scmp.ne.s32.totalorder %s73, %s74
      %p83 = scmp.eq.s32.totalorder %s21, 0
      %p84 = por %p82, %p83
      %p85 = scmp.ne.s32.totalorder %s73, %s74
      %p86 = scmp.eq.s32.totalorder %s22, 1
      %p87 = por %p85, %p86
      %p89 = scmp.ne.s32.totalorder %s74, %s88
      %p90 = scmp.eq.s32.totalorder %s22, 0
      %p91 = por %p89, %p90
      %s92 = ssub.s32 %s16, %s23
      %p93 = scmp.eq.s32.totalorder %s92, 0
      %s95 = sadd.s32 %s94, 1
      %s96 = scalar_select %p93, %s94, %s95
      %p99 = pneg %p93
      %p100 = scmp.eq.s32.totalorder %s16, 1
      %p101 = por %p99, %p100
      %p102 = scmp.ne.s32.totalorder %s94, %s97
      %p103 = scmp.eq.s32.totalorder %s16, 0
      %p104 = por %p102, %p103
      %p105 = scmp.ne.s32.totalorder %s94, %s97
      %p106 = scmp.eq.s32.totalorder %s21, 1
      %p107 = por %p105, %p106
      %p108 = scmp.ne.s32.totalorder %s97, %s98
      %p109 = scmp.eq.s32.totalorder %s21, 0
      %p110 = por %p108, %p109
      %p111 = scmp.ne.s32.totalorder %s97, %s98
      %p112 = scmp.eq.s32.totalorder %s22, 1
      %p113 = por %p111, %p112
      %p115 = scmp.ne.s32.totalorder %s98, %s114
      %p116 = scmp.eq.s32.totalorder %s22, 0
      %p117 = por %p115, %p116
      %p118 = scmp.le.s32.totalorder 1, %s16
      %p119 = scmp.lt.s32.totalorder %s16, 3
      %p120 = pnand %p118, %p119
      %p121 = pneg %p120
      // Predicated region
      $region9: #{tpu_custom_call.1} parent=5 // pred_check
        _
      $region10: #{tpu_custom_call.1} parent=5 // pred_check_branch
        %123 = sbr.rel (%p120) target = $region12
      $region11: #{tpu_custom_call.1} parent=5 // pred_region
        %s124 = ssub.s32 %s16, 1
        // Predicated region
        $region13: #{tpu_custom_call.1} parent=11 // pred_check
          %p125 = pneg %p63
        $region14: #{tpu_custom_call.1} parent=11 // pred_check_branch
          %127 = sbr.rel (%p125) target = $region16
        $region15: #{tpu_custom_call.1} parent=11 // pred_region
          %s129 = ssub.s32 3072, 3072
          %130 = vsyncadd [#allocation6], %s129
          %s131 = sshll.u32 [#allocation5], 4
          %s132 = int_to_ptr.vmem [resolvable:$true] %s131
          %137 = dma.hbm_to_vmem [thread:$0]  %s1, 3072, %s132, [#allocation6], 128, 128, 8
        $region16: #{tpu_custom_call.1} parent=11 // pred_fallthru
          _
        // Predicated region
        $region17: #{tpu_custom_call.1} parent=11 // pred_check
          %p138 = pneg %p84
        $region18: #{tpu_custom_call.1} parent=11 // pred_check_branch
          %140 = sbr.rel (%p138) target = $region20
        $region19: #{tpu_custom_call.1} parent=11 // pred_region
          _
        $region20: #{tpu_custom_call.1} parent=11 // pred_fallthru
          _
      $region12: #{tpu_custom_call.1} parent=5 // pred_fallthru
        _
      %p141 = scmp.lt.s32.totalorder %s16, 2
      // Predicated region
      $region21: #{tpu_custom_call.1} parent=5 // pred_check
        %p142 = pneg %p141
      $region22: #{tpu_custom_call.1} parent=5 // pred_check_branch
        %144 = sbr.rel (%p142) target = $region24
      $region23: #{tpu_custom_call.1} parent=5 // pred_region
        // Predicated region
        $region25: #{tpu_custom_call.1} parent=23 // pred_check
          %p145 = pneg %p36
        $region26: #{tpu_custom_call.1} parent=23 // pred_check_branch
          %147 = sbr.rel (%p145) target = $region28
        $region27: #{tpu_custom_call.1} parent=23 // pred_region
          %s148 = sand.u32 %s26, 1
          %s149 = scalar_lea.sflag [#allocation3], %s148
          %s150 = sand.u32 %s26, 1
          %s151 = smul.addr %s150, 32
          %s152 = scalar_lea.vmem [#allocation2], %s151
          %s153 = smul.u32 2, %s16
          %s155 = ssub.s32 512, 512
          %156 = vsyncadd %s149, %s155
          %s157 = smul.addr %s153, 2
          %s158 = smul.addr %s157, 128
          %s159 = scalar_lea.hbm %s0, %s158
          %s160 = sshll.u32 %s152, 4
          %s161 = int_to_ptr.vmem [resolvable:$true] %s160
          %166 = dma.hbm_to_vmem [thread:$0]  %s159, 512, %s161, %s149, 256, 256, 16
        $region28: #{tpu_custom_call.1} parent=23 // pred_fallthru
          _
      $region24: #{tpu_custom_call.1} parent=5 // pred_fallthru
        _
      %p167 = scmp.le.s32.totalorder 1, %s16
      %p168 = scmp.lt.s32.totalorder %s16, 3
      %p169 = pnand %p167, %p168
      %p170 = pneg %p169
      // Predicated region
      $region29: #{tpu_custom_call.1} parent=5 // pred_check
        _
      $region30: #{tpu_custom_call.1} parent=5 // pred_check_branch
        %172 = sbr.rel (%p169) target = $region32
      $region31: #{tpu_custom_call.1} parent=5 // pred_region
        %s173 = ssub.s32 %s16, 1
        %s174 = sand.u32 %s29, 1
        %s175 = scalar_lea.sflag [#allocation3], %s174
        %s176 = sand.u32 %s29, 1
        %s177 = smul.addr %s176, 32
        %s178 = scalar_lea.vmem [#allocation2], %s177
        // Predicated region
        $region33: #{tpu_custom_call.1} parent=31 // pred_check
          %p179 = pneg %p42
        $region34: #{tpu_custom_call.1} parent=31 // pred_check_branch
          %181 = sbr.rel (%p179) target = $region36
        $region35: #{tpu_custom_call.1} parent=31 // pred_region
          %182 = dma.done %s175, 512
        $region36: #{tpu_custom_call.1} parent=31 // pred_fallthru
          _
        // Predicated region
        $region37: #{tpu_custom_call.1} parent=31 // pred_check
          %p183 = pneg %p63
        $region38: #{tpu_custom_call.1} parent=31 // pred_check_branch
          %185 = sbr.rel (%p183) target = $region40
        $region39: #{tpu_custom_call.1} parent=31 // pred_region
          %186 = dma.done [#allocation6], 3072
        $region40: #{tpu_custom_call.1} parent=31 // pred_fallthru
          _
        %s187 = sand.u32 %s29, 1
        %s188 = scalar_lea.sflag [#allocation3], %s187
        %s189 = sand.u32 %s29, 1
        %s190 = smul.addr %s189, 32
        %s191 = scalar_lea.vmem [#allocation2], %s190
        %p192 = pneg %p42
        %p193 = pneg %p39
        %p194 = pneg %p63
        %p195 = pneg %p60
        %p196 = pneg %p84
        %p197 = pneg %p81
        %p198 = pneg %p110
        %p199 = pneg %p107
        %s200 = sand.u32 %s97, 1
        %s201 = scalar_lea.sflag [#allocation4], %s200
        %s202 = sand.u32 %s97, 1
        %s203 = smul.addr %s202, 16
        %s204 = scalar_lea.vmem [#allocation7], %s203
        %s205 = smul.u32 2, %s21
        %s206 = smul.u32 2, %s21
        %v207 = vld [vmem:[%s178] sm:$0xff]
        %v208 = vld [vmem:[%s178 + $0x8] sm:$0xff]
        %v209 = vld [vmem:[%s178 + $0x10] sm:$0xff]
        %v210 = vld [vmem:[%s178 + $0x18] sm:$0xff]
        %v211 = vld [vmem:[#allocation5] sm:$0xff]
        %v212 = vld [vmem:[#allocation5 + $0x8] sm:$0xff]
        %v213 = vld [vmem:[#allocation5 + $0x10] sm:$0xff]
        %v214 = vld [vmem:[#allocation5 + $0x18] sm:$0xff]
        %v215 = vld [vmem:[#allocation5 + $0x20] sm:$0xff]
        %v216 = vld [vmem:[#allocation5 + $0x28] sm:$0xff]
        %v217 = vld [vmem:[#allocation5 + $0x30] sm:$0xff]
        %v218 = vld [vmem:[#allocation5 + $0x38] sm:$0xff]
        %v219 = vld [vmem:[#allocation5 + $0x40] sm:$0xff]
        %v220 = vld [vmem:[#allocation5 + $0x48] sm:$0xff]
        %v221 = vld [vmem:[#allocation5 + $0x50] sm:$0xff]
        %v222 = vld [vmem:[#allocation5 + $0x58] sm:$0xff]
        %v223 = vld [vmem:[#allocation5 + $0x60] sm:$0xff]
        %v224 = vld [vmem:[#allocation5 + $0x68] sm:$0xff]
        %v225 = vld [vmem:[#allocation5 + $0x70] sm:$0xff]
        %v226 = vld [vmem:[#allocation5 + $0x78] sm:$0xff]
        %v227 = vld [vmem:[#allocation5 + $0x80] sm:$0xff]
        %v228 = vld [vmem:[#allocation5 + $0x88] sm:$0xff]
        %v229 = vld [vmem:[#allocation5 + $0x90] sm:$0xff]
        %v230 = vld [vmem:[#allocation5 + $0x98] sm:$0xff]
        %v231 = vld [vmem:[#allocation5 + $0xa0] sm:$0xff]
        %v232 = vld [vmem:[#allocation5 + $0xa8] sm:$0xff]
        %v233 = vld [vmem:[#allocation5 + $0xb0] sm:$0xff]
        %v234 = vld [vmem:[#allocation5 + $0xb8] sm:$0xff]
        %v235 = vld [vmem:[%s2] sm:$0x1]
        %v237 = vlaneseq
        %v238 = vshrl.u32 %v237, 7
        %v239 = vsub.s32 0, %v238
        %v240 = vrot.slane %v235, %v239
        %vm242 = vcmask 523264
        %v244 = vsel %vm242, %v208, 0
        %v247 = vsel %vm242, %v210, 0
        %249 = vmatprep.subr.mxu0 0.0
        %250 = vmatpush1.msra.mxu0 %v226
        %251 = vmatprep.subr.mxu0 0.0
        %252 = vmatpush1.msra.mxu0 %v225
        %253 = vmatprep.subr.mxu0 0.0
        %254 = vmatpush1.msra.mxu0 %v224
        %255 = vmatprep.subr.mxu0 0.0
        %256 = vmatpush1.msra.mxu0 %v223
        %257 = vmatprep.subr.mxu0 0.0
        %258 = vmatpush1.msra.mxu0 %v222
        %259 = vmatprep.subr.mxu0 0.0
        %260 = vmatpush1.msra.mxu0 %v221
        %261 = vmatprep.subr.mxu0 0.0
        %262 = vmatpush1.msra.mxu0 %v220
        %263 = vmatprep.subr.mxu0 0.0
        %264 = vmatpush1.msra.mxu0 %v219
        %265 = vmatprep.subr.mxu0 0.0
        %266 = vmatpush1.msra.mxu0 %v218
        %267 = vmatprep.subr.mxu0 0.0
        %268 = vmatpush1.msra.mxu0 %v217
        %269 = vmatprep.subr.mxu0 0.0
        %270 = vmatpush1.msra.mxu0 %v216
        %271 = vmatprep.subr.mxu0 0.0
        %272 = vmatpush1.msra.mxu0 %v215
        %273 = vmatprep.subr.mxu0 0.0
        %274 = vmatpush1.msra.mxu0 %v214
        %275 = vmatprep.subr.mxu0 0.0
        %276 = vmatpush1.msra.mxu0 %v213
        %277 = vmatprep.subr.mxu0 0.0
        %278 = vmatpush1.msra.mxu0 %v212
        %279 = vmatprep.subr.mxu0 0.0
        %280 = vmatpush1.msra.mxu0 %v211
        %281 = vmatprep.subr.mxu0 0.0
        %282 = vmatpush2.msra.mxu0 0.0
        %283 = vmatprep.subr.mxu0 0.0
        %284 = vmatpush2.msra.mxu0 0.0
        %285 = vmatprep.subr.mxu0 0.0
        %286 = vmatpush2.msra.mxu0 0.0
        %287 = vmatprep.subr.mxu0 0.0
        %288 = vmatpush2.msra.mxu0 0.0
        %289 = vmatprep.subr.mxu0 0.0
        %290 = vmatpush2.msra.mxu0 0.0
        %291 = vmatprep.subr.mxu0 0.0
        %292 = vmatpush2.msra.mxu0 0.0
        %293 = vmatprep.subr.mxu0 0.0
        %294 = vmatpush2.msra.mxu0 0.0
        %295 = vmatprep.subr.mxu0 0.0
        %296 = vmatpush2.msra.mxu0 0.0
        %297 = vmatprep.subr.mxu0 0.0
        %298 = vmatpush2.msra.mxu0 %v234
        %299 = vmatprep.subr.mxu0 0.0
        %300 = vmatpush2.msra.mxu0 %v233
        %301 = vmatprep.subr.mxu0 0.0
        %302 = vmatpush2.msra.mxu0 %v232
        %303 = vmatprep.subr.mxu0 0.0
        %304 = vmatpush2.msra.mxu0 %v231
        %305 = vmatprep.subr.mxu0 0.0
        %306 = vmatpush2.msra.mxu0 %v230
        %307 = vmatprep.subr.mxu0 0.0
        %308 = vmatpush2.msra.mxu0 %v229
        %309 = vmatprep.subr.mxu0 0.0
        %310 = vmatpush2.msra.mxu0 %v228
        %311 = vmatprep.subr.mxu0 0.0
        %312 = vmatpush2.msra.mxu0 %v227
        %313 = vmatprep.mubr.f32.mxu0 %v244
        %314 = vmatmul.mubr.f32.gmra.mxu0 %v207
        %v315 = vpop.f32.mrf.mxu0
        %v316 = vadd.f32 %v240, %v315
        %v317 = vpop.f32.mrf.mxu0
        %318 = vmatprep.mubr.f32.mxu0 %v247
        %319 = vmatmul.mubr.f32.gmra.mxu0 %v209
        %v320 = vpop.f32.mrf.mxu0
        %v321 = vadd.f32 %v240, %v320
        %v322 = vpop.f32.mrf.mxu0
        %323 = vdwg.mxu0
        %v324 = vmax.f32 %v316, 0.0
        %v325 = vmax.f32 %v321, 0.0
        %326 = vst [vmem:[%s204] sm:$0xff] %v324
        %327 = vst [vmem:[%s204 + $0x8] sm:$0xff] %v325
        %s328 = sand.u32 %s97, 1
        %s329 = scalar_lea.sflag [#allocation4], %s328
        %s330 = sand.u32 %s97, 1
        %s331 = smul.addr %s330, 16
        %s332 = scalar_lea.vmem [#allocation7], %s331
        // Predicated region
        $region41: #{tpu_custom_call.1} parent=31 // pred_check
          %p333 = pneg %p107
        $region42: #{tpu_custom_call.1} parent=31 // pred_check_branch
          %335 = sbr.rel (%p333) target = $region44
        $region43: #{tpu_custom_call.1} parent=31 // pred_region
          %s336 = smul.u32 2, %s21
          %s338 = ssub.s32 256, 256
          %339 = vsyncadd %s329, %s338
          %s340 = smul.addr %s336, 128
          %s341 = scalar_lea.hbm %s3, %s340
          %s342 = sshll.u32 %s332, 4
          %s343 = int_to_ptr.vmem [resolvable:$true] %s342
          %348 = dma.vmem_to_hbm [thread:$0]  %s343, 256, %s341, %s329, 128, 128, 8
        $region44: #{tpu_custom_call.1} parent=31 // pred_fallthru
          _
      $region32: #{tpu_custom_call.1} parent=5 // pred_fallthru
        _
      %p349 = scmp.le.s32.totalorder 2, %s16
      // Predicated region
      $region45: #{tpu_custom_call.1} parent=5 // pred_check
        %p350 = pneg %p349
      $region46: #{tpu_custom_call.1} parent=5 // pred_check_branch
        %352 = sbr.rel (%p350) target = $region48
      $region47: #{tpu_custom_call.1} parent=5 // pred_region
        %s353 = ssub.s32 %s16, 2
        // Predicated region
        $region49: #{tpu_custom_call.1} parent=47 // pred_check
          %p354 = pneg %p113
        $region50: #{tpu_custom_call.1} parent=47 // pred_check_branch
          %356 = sbr.rel (%p354) target = $region52
        $region51: #{tpu_custom_call.1} parent=47 // pred_region
          %s357 = sand.u32 %s98, 1
          %s358 = scalar_lea.sflag [#allocation4], %s357
          %s359 = sand.u32 %s98, 1
          %s360 = smul.addr %s359, 16
          %s361 = scalar_lea.vmem [#allocation7], %s360
          %362 = dma.done %s358, 256
        $region52: #{tpu_custom_call.1} parent=47 // pred_fallthru
          _
      $region48: #{tpu_custom_call.1} parent=5 // pred_fallthru
        _
    $region6: #{tpu_custom_call.1} parent=1 // loop_footer
      %s20 = sadd.s32 1, %s16
    $region7: #{tpu_custom_call.1} parent=1 // loop_footer_branch
      %15 = sbr.rel target = $region3
    $region8: #{tpu_custom_call.1} parent=1 // loop_exit
      _
    %363 = vsyncpa [#allocation3], 1
    %s364 = scalar_lea.sflag [#allocation3], 1
    %365 = vsyncpa %s364, 1
    %366 = vsyncpa [#allocation6], 1
    %367 = vsyncpa [#allocation4], 1
    %s368 = scalar_lea.sflag [#allocation4], 1
    %369 = vsyncpa %s368, 1

</llo_original>
